<compile_context>
chip_gen: v5e
topology: v5e:2x2
jax: 0.10.0
libtpu: 0.0.40
codegen_flags: <defaults>
</compile_context>

<pallas_src>
import functools

import jax
import jax.numpy as jnp
from jax.experimental import pallas as pl
from jax.experimental.pallas import tpu as pltpu


def _round_up(x: int, m: int) -> int:
    return ((x + m - 1) // m) * m


def _cdiv(a: int, b: int) -> int:
    return (a + b - 1) // b


def _activation(h, use_gelu: bool, approximate: bool):
    if use_gelu:
        # torch.nn.GELU() default is the exact erf form -> approximate=False.
        return jax.nn.gelu(h, approximate=approximate)
    return jnp.maximum(h, 0.0)


def adapter_kernel(x_ref, w1_ref, b1_ref, w2_ref, b2_ref, o_ref, *,
                   use_gelu, gelu_approximate):
    # x_ref: (tile_m, Dp)   w1_ref: (Dp, Dap)   b1_ref: (1, Dap)
    # w2_ref: (Dap, Dp)     b2_ref: (1, Dp)     o_ref: (tile_m, Dp)
    x = x_ref[...]
    # fc1 + activation (MXU matmul, f32 accumulation; bias + act in f32).
    h = jnp.dot(x, w1_ref[...], preferred_element_type=jnp.float32)
    h = _activation(h + b1_ref[...].astype(jnp.float32), use_gelu, gelu_approximate)
    # fc2 + activation (f32 activations downcast to weight dtype for the MXU).
    h2 = jnp.dot(h.astype(w2_ref.dtype), w2_ref[...],
                 preferred_element_type=jnp.float32)
    h2 = _activation(h2 + b2_ref[...].astype(jnp.float32), use_gelu, gelu_approximate)
    # Residual connection in f32; single cast for the lane-dense store.
    o_ref[...] = (x.astype(jnp.float32) + h2).astype(o_ref.dtype)


def _vmem_footprint_bytes(tile_m, d_in_p, d_a_p, io_itemsize):
    # x + out blocks, double-buffered by the pipeline.
    io = 2 * 2 * tile_m * d_in_p * io_itemsize
    # Weights/biases: constant index_map -> logically resident, but counted
    # double-buffered (conservative; Mosaic may dedup constant-index buffers).
    w = 2 * (2 * d_in_p * d_a_p + d_in_p + d_a_p) * io_itemsize
    # f32 intermediates inside the body (h, h2, x_f32).
    inter = tile_m * (d_a_p + 2 * d_in_p) * 4
    return io + w + inter


def _generation_budgets():
    """Returns (tile VMEM budget, vmem_limit cap, target row tile)."""
    vmem_cap = 64 * 2**20  # conservative default (v7x-sized)
    try:
        vmem_cap = int(pltpu.get_tpu_info().vmem_capacity_bytes)
    except Exception:
        pass  # non-TPU backend / older jax: stay conservative
    if vmem_cap >= 96 * 2**20:
        # v5e / v6e: 128 MiB VMEM per core -> big tiles amortize per-step cost.
        return 96 * 2**20, 100 * 2**20, 1024
    # v7x: 64 MiB physical -> leave headroom for Mosaic internal scratch.
    return 36 * 2**20, 52 * 2**20, 512


def _pick_tile_m(M, d_in_p, d_a_p, io_itemsize, target, budget):
    tile = min(target, _round_up(max(M, 8), 8))
    while tile > 128 and _vmem_footprint_bytes(tile, d_in_p, d_a_p,
                                               io_itemsize) > budget:
        tile = max(128, tile // 2)
    # Ensure >=2 grid blocks for moderate M so dimension_semantics=("parallel",)
    # can shard the row grid across v7x's two TensorCores (one extra grid step
    # on v5e/v6e is negligible).
    if tile >= M > 256:
        tile = max(256, _round_up(_cdiv(M, 2), 256))
    return tile


def adapter_forward(x, w1, b1, w2, b2, *, use_gelu=False, gelu_approximate=False,
                    io_dtype=jnp.bfloat16, tile_m=None):
    """x: [B, S, D_in] -> [B, S, D_in] (returned in io_dtype).

    w1: [D_in, D_a], b1: [D_a], w2: [D_a, D_in], b2: [D_in].
    All HBM traffic is cast to io_dtype (bf16 by default); matmul accumulation,
    bias, activation and the residual are computed in f32 inside the kernel.
    """
    B, S, D_in = x.shape
    D_a = w1.shape[1]
    M = B * S

    io_dtype = jnp.dtype(io_dtype)
    io_itemsize = io_dtype.itemsize

    # Lane padding of the feature dims, only when actually needed. Zero padding
    # is exact: act(0) == 0 and zero weight/bias columns contribute nothing.
    d_in_p = _round_up(D_in, 128)
    d_a_p = _round_up(D_a, 128)
    pad_f = d_in_p - D_in
    pad_a = d_a_p - D_a

    budget, vmem_cap, target = _generation_budgets()
    if tile_m is None:
        tile_m = _pick_tile_m(M, d_in_p, d_a_p, io_itemsize, target, budget)
    grid_m = _cdiv(M, tile_m)  # ragged last block -> masked writeback, no row pad

    x2d = x.reshape(M, D_in).astype(io_dtype)
    if pad_f:
        x2d = jnp.pad(x2d, ((0, 0), (0, pad_f)))
    w1p = jnp.pad(w1.astype(io_dtype), ((0, pad_f), (0, pad_a)))
    b1p = jnp.pad(b1.astype(io_dtype), ((0, pad_a),)).reshape(1, d_a_p)
    w2p = jnp.pad(w2.astype(io_dtype), ((0, pad_a), (0, pad_f)))
    b2p = jnp.pad(b2.astype(io_dtype), ((0, pad_f),)).reshape(1, d_in_p)

    kernel = functools.partial(adapter_kernel, use_gelu=use_gelu,
                               gelu_approximate=gelu_approximate)

    footprint = _vmem_footprint_bytes(tile_m, d_in_p, d_a_p, io_itemsize)
    vmem_limit = int(min(max(footprint + 8 * 2**20, 32 * 2**20), vmem_cap))

    w_bytes = (2 * d_in_p * d_a_p + d_in_p + d_a_p) * io_itemsize
    cost = pl.CostEstimate(
        flops=4 * M * d_in_p * d_a_p,
        transcendentals=(M * (d_a_p + d_in_p)) if use_gelu else 0,
        bytes_accessed=2 * M * d_in_p * io_itemsize + w_bytes,
    )

    out2d = pl.pallas_call(
        kernel,
        out_shape=jax.ShapeDtypeStruct((M, d_in_p), io_dtype),
        grid_spec=pltpu.PrefetchScalarGridSpec(
            num_scalar_prefetch=0,
            grid=(grid_m,),
            in_specs=[
                pl.BlockSpec((tile_m, d_in_p), lambda i: (i, 0)),  # x (streamed)
                pl.BlockSpec((d_in_p, d_a_p), lambda i: (0, 0)),   # fc1 W (resident)
                pl.BlockSpec((1, d_a_p), lambda i: (0, 0)),        # fc1 b
                pl.BlockSpec((d_a_p, d_in_p), lambda i: (0, 0)),   # fc2 W (resident)
                pl.BlockSpec((1, d_in_p), lambda i: (0, 0)),       # fc2 b
            ],
            out_specs=pl.BlockSpec((tile_m, d_in_p), lambda i: (i, 0)),
        ),
        compiler_params=pltpu.CompilerParams(
            dimension_semantics=("parallel",),
            vmem_limit_bytes=vmem_limit,
        ),
        input_output_aliases={0: 0},  # out reuses x2d's HBM buffer
        cost_estimate=cost,
    )(x2d, w1p, b1p, w2p, b2p)

    out2d = out2d[:, :D_in] if pad_f else out2d
    return out2d.reshape(B, S, D_in)


def adapter_reference(x, w1, b1, w2, b2, *, use_gelu=False):
    h = _activation(jnp.einsum("bsd,de->bse", x, w1) + b1, use_gelu, False)
    h = _activation(jnp.einsum("bse,ed->bsd", h, w2) + b2, use_gelu, False)
    return x + h


if __name__ == "__main__":
    # Small shapes consistent with the module: [B, S, input_dim] tokens.
    B, S = 2, 8
    input_dim, adapter_dim = 32, 16

    key = jax.random.PRNGKey(0)
    kx, k1, k2, k3, k4 = jax.random.split(key, 5)

    x = jax.random.normal(kx, (B, S, input_dim), dtype=jnp.float32)

    # Deterministic synthetic parameter init (PyTorch-Linear-like scale).
    bound1 = 1.0 / (input_dim ** 0.5)
    bound2 = 1.0 / (adapter_dim ** 0.5)
    w1 = jax.random.uniform(k1, (input_dim, adapter_dim), jnp.float32,
                            minval=-bound1, maxval=bound1)
    b1 = jax.random.uniform(k2, (adapter_dim,), jnp.float32,
                            minval=-bound1, maxval=bound1)
    w2 = jax.random.uniform(k3, (adapter_dim, input_dim), jnp.float32,
                            minval=-bound2, maxval=bound2)
    b2 = jax.random.uniform(k4, (input_dim,), jnp.float32,
                            minval=-bound2, maxval=bound2)

    ref = adapter_reference(x, w1, b1, w2, b2, use_gelu=False)
    ref_g = adapter_reference(x, w1, b1, w2, b2, use_gelu=True)

    # Default bf16-I/O path, ReLU (module default activation).
    out = jax.block_until_ready(adapter_forward(x, w1, b1, w2, b2, use_gelu=False))
    assert out.shape == x.shape and out.dtype == jnp.bfloat16
    assert jnp.allclose(out.astype(jnp.float32), ref, atol=6e-2, rtol=6e-2), \
        "bf16 ReLU path mismatch"

    # Default bf16-I/O path, GELU (exact erf form, matching torch.nn.GELU()).
    out_g = jax.block_until_ready(adapter_forward(x, w1, b1, w2, b2, use_gelu=True))
    assert jnp.allclose(out_g.astype(jnp.float32), ref_g, atol=6e-2, rtol=6e-2), \
        "bf16 GELU path mismatch"

    # f32-I/O path for a tighter numerical check of the kernel math.
    out_f = jax.block_until_ready(
        adapter_forward(x, w1, b1, w2, b2, use_gelu=False, io_dtype=jnp.float32))
    assert out_f.dtype == jnp.float32
    assert jnp.allclose(out_f, ref, atol=5e-3, rtol=5e-3), "f32 ReLU path mismatch"

    out_gf = jax.block_until_ready(
        adapter_forward(x, w1, b1, w2, b2, use_gelu=True, io_dtype=jnp.float32))
    assert jnp.allclose(out_gf, ref_g, atol=5e-3, rtol=5e-3), "f32 GELU path mismatch"

    print("KERNEL_OK")
</pallas_src>

<mosaic_0001>
module attributes {stable_mosaic.version = 11 : i64} {
  func.func @adapter_kernel(%arg0: i32, %arg1: memref<16x128xbf16, #tpu.memory_space<vmem>>, %arg2: memref<128x128xbf16, #tpu.memory_space<vmem>>, %arg3: memref<1x128xbf16, #tpu.memory_space<vmem>>, %arg4: memref<128x128xbf16, #tpu.memory_space<vmem>>, %arg5: memref<1x128xbf16, #tpu.memory_space<vmem>>, %arg6: memref<16x128xbf16, #tpu.memory_space<vmem>>) attributes {dimension_semantics = [#tpu.dimension_semantics<parallel>], iteration_bounds = array<i64: 1>, scalar_prefetch = 0 : i64, scratch_operands = 0 : i64, tpu.core_type = #tpu.core_type<tc>, window_params = [{transform_indices = @transform_0, window_bounds = array<i64: 16, 128>}, {pipeline_mode = #tpu.pipeline_mode<synchronous>, transform_indices = @transform_1, window_bounds = array<i64: 128, 128>}, {pipeline_mode = #tpu.pipeline_mode<synchronous>, transform_indices = @transform_2, window_bounds = array<i64: 1, 128>}, {pipeline_mode = #tpu.pipeline_mode<synchronous>, transform_indices = @transform_3, window_bounds = array<i64: 128, 128>}, {pipeline_mode = #tpu.pipeline_mode<synchronous>, transform_indices = @transform_4, window_bounds = array<i64: 1, 128>}, {transform_indices = @transform_5, window_bounds = array<i64: 16, 128>}]} {
    %c0 = arith.constant 0 : index
    %c0_0 = arith.constant 0 : index
    %0 = vector.load %arg1[%c0, %c0_0] : memref<16x128xbf16, #tpu.memory_space<vmem>>, vector<16x128xbf16>
    %c0_1 = arith.constant 0 : index
    %c0_2 = arith.constant 0 : index
    %1 = vector.load %arg2[%c0_1, %c0_2] : memref<128x128xbf16, #tpu.memory_space<vmem>>, vector<128x128xbf16>
    %cst = arith.constant dense<0.000000e+00> : vector<16x128xf32>
    %2 = tpu.matmul %0, %1, %cst {dimension_numbers = #tpu.dot_dimension_numbers<[1], [0], [0], [1], [0, 0, 1, 1], [], []>} : vector<16x128xbf16>, vector<128x128xbf16>, vector<16x128xf32> -> vector<16x128xf32>
    %c0_3 = arith.constant 0 : index
    %c0_4 = arith.constant 0 : index
    %3 = vector.load %arg3[%c0_3, %c0_4] : memref<1x128xbf16, #tpu.memory_space<vmem>>, vector<1x128xbf16>
    %4 = arith.extf %3 : vector<1x128xbf16> to vector<1x128xf32>
    %5 = vector.broadcast %4 : vector<1x128xf32> to vector<16x128xf32>
    %6 = arith.addf %2, %5 : vector<16x128xf32>
    %cst_5 = arith.constant 0.000000e+00 : f32
    %7 = vector.broadcast %cst_5 : f32 to vector<16x128xf32>
    %8 = arith.maximumf %6, %7 : vector<16x128xf32>
    %9 = arith.truncf %8 : vector<16x128xf32> to vector<16x128xbf16>
    %c0_6 = arith.constant 0 : index
    %c0_7 = arith.constant 0 : index
    %10 = vector.load %arg4[%c0_6, %c0_7] : memref<128x128xbf16, #tpu.memory_space<vmem>>, vector<128x128xbf16>
    %cst_8 = arith.constant dense<0.000000e+00> : vector<16x128xf32>
    %11 = tpu.matmul %9, %10, %cst_8 {dimension_numbers = #tpu.dot_dimension_numbers<[1], [0], [0], [1], [0, 0, 1, 1], [], []>} : vector<16x128xbf16>, vector<128x128xbf16>, vector<16x128xf32> -> vector<16x128xf32>
    %c0_9 = arith.constant 0 : index
    %c0_10 = arith.constant 0 : index
    %12 = vector.load %arg5[%c0_9, %c0_10] : memref<1x128xbf16, #tpu.memory_space<vmem>>, vector<1x128xbf16>
    %13 = arith.extf %12 : vector<1x128xbf16> to vector<1x128xf32>
    %14 = vector.broadcast %13 : vector<1x128xf32> to vector<16x128xf32>
    %15 = arith.addf %11, %14 : vector<16x128xf32>
    %cst_11 = arith.constant 0.000000e+00 : f32
    %16 = vector.broadcast %cst_11 : f32 to vector<16x128xf32>
    %17 = arith.maximumf %15, %16 : vector<16x128xf32>
    %18 = arith.extf %0 : vector<16x128xbf16> to vector<16x128xf32>
    %19 = arith.addf %18, %17 : vector<16x128xf32>
    %20 = arith.truncf %19 : vector<16x128xf32> to vector<16x128xbf16>
    %c0_12 = arith.constant 0 : index
    %c0_13 = arith.constant 0 : index
    %21 = vector.load %arg6[%c0_12, %c0_13] : memref<16x128xbf16, #tpu.memory_space<vmem>>, vector<16x128xbf16>
    tpu.vector_store %arg6[%c0_12, %c0_13], %20 {strides = array<i32>} : memref<16x128xbf16, #tpu.memory_space<vmem>>, vector<16x128xbf16>,
    return
  }
  func.func @transform_0(%arg0: i32) -> (i32, i32) {
    %c0_i32 = arith.constant 0 : i32
    %c0_i32_0 = arith.constant 0 : i32
    return %arg0, %c0_i32 : i32, i32
  }
  func.func @transform_1(%arg0: i32) -> (i32, i32) {
    %c0_i32 = arith.constant 0 : i32
    %c0_i32_0 = arith.constant 0 : i32
    %c0_i32_1 = arith.constant 0 : i32
    return %c0_i32, %c0_i32_0 : i32, i32
  }
  func.func @transform_2(%arg0: i32) -> (i32, i32) {
    %c0_i32 = arith.constant 0 : i32
    %c0_i32_0 = arith.constant 0 : i32
    %c0_i32_1 = arith.constant 0 : i32
    return %c0_i32, %c0_i32_0 : i32, i32
  }
  func.func @transform_3(%arg0: i32) -> (i32, i32) {
    %c0_i32 = arith.constant 0 : i32
    %c0_i32_0 = arith.constant 0 : i32
    %c0_i32_1 = arith.constant 0 : i32
    return %c0_i32, %c0_i32_0 : i32, i32
  }
  func.func @transform_4(%arg0: i32) -> (i32, i32) {
    %c0_i32 = arith.constant 0 : i32
    %c0_i32_0 = arith.constant 0 : i32
    %c0_i32_1 = arith.constant 0 : i32
    return %c0_i32, %c0_i32_0 : i32, i32
  }
  func.func @transform_5(%arg0: i32) -> (i32, i32) {
    %c0_i32 = arith.constant 0 : i32
    %c0_i32_0 = arith.constant 0 : i32
    return %arg0, %c0_i32 : i32, i32
  }
}

</mosaic_0001>

<llo_original>
// kernel: tpu_custom_call.1
$region0: #{tpu_custom_call.1}
  #allocation0 [shape = 'u32[]', space=smem, size = 0x4, offset = 0x4, fixed_abs, tag = 'smem constant byte address 0x4 - core index']
  #allocation1 [shape = 'u32[72,128]{1,0:T(1,128)}', space=vmem, size = 0x9000, scoped, tag = 'internal scratch']
  %s0 = inlined_call_operand.hbm [shape: bf16[16,128], index: 0, kind: input, shape index: {}, may-alias: {0,5}]
  %s1 = inlined_call_operand.hbm [shape: bf16[128,128], index: 1, kind: input, shape index: {}]
  %s2 = inlined_call_operand.vmem [shape: bf16[1,128], index: 2, kind: input, shape index: {}]
  %s3 = inlined_call_operand.hbm [shape: bf16[128,128], index: 3, kind: input, shape index: {}]
  %s4 = inlined_call_operand.vmem [shape: bf16[1,128], index: 4, kind: input, shape index: {}]
  %s5 = inlined_call_operand.hbm [shape: bf16[16,128], index: 5, kind: output, shape index: {}, may-alias: {0,5}]
  %s6 = sld [smem:[#allocation0]]
  $region42: #{tpu_custom_call.1} parent=0
    _
  %s8 = ssub.s32 1, %s6
  %s9 = scalar_select 0, %s8, %s6
  $region1: #{tpu_custom_call.1} parent=0
    #allocation2 [shape = 'u8[4096]{0}', space=vmem, size = 0x1000, scoped, tag = 'input window, operand 0, single buffered']
    #allocation3 [shape = 's32[1]{0}', space=sflag, size = 0x4, scoped, tag = 'scoped memory for tpu_custom_call.1']
    #allocation4 [shape = 's32[1]{0}', space=sflag, size = 0x4, scoped, tag = 'scoped memory for tpu_custom_call.1']
    #allocation5 [shape = 'u8[32768]{0}', space=vmem, size = 0x8000, scoped, tag = 'input window, operand 1, single buffered']
    #allocation6 [shape = 's32[1]{0}', space=sflag, size = 0x4, scoped, tag = 'scoped memory for tpu_custom_call.1']
    #allocation7 [shape = 'u8[32768]{0}', space=vmem, size = 0x8000, scoped, tag = 'input window, operand 3, single buffered']
    #allocation8 [shape = 'u8[4096]{0}', space=vmem, size = 0x1000, scoped, tag = 'output window, operand 0, single buffered']
    %10 = vsyncpa [#allocation3], 0
    %11 = vsyncpa [#allocation6], 0
    %12 = vsyncpa [#allocation4], 0
    // Predicated region
    $region2: #{tpu_custom_call.1} parent=1 // pred_check
      _
    $region3: #{tpu_custom_call.1} parent=1 // pred_check_branch
      %14 = sbr.rel (0) target = $region5
    $region4: #{tpu_custom_call.1} parent=1 // pred_region
      %16 = vsyncadd [#allocation3], 0
      %s17 = sshll.u32 %s0, 4
      %s18 = int_to_ptr.hbm [resolvable:$true] %s17
      %s19 = sshll.u32 [#allocation2], 4
      %s20 = int_to_ptr.vmem [resolvable:$true] %s19
      %25 = dma.hbm_to_vmem [thread:$0]  %s18, 128, %s20, [#allocation3], 64, 64, 4
    $region5: #{tpu_custom_call.1} parent=1 // pred_fallthru
      _
    // Predicated region
    $region6: #{tpu_custom_call.1} parent=1 // pred_check
      _
    $region7: #{tpu_custom_call.1} parent=1 // pred_check_branch
      %27 = sbr.rel (0) target = $region9
    $region8: #{tpu_custom_call.1} parent=1 // pred_region
      %29 = vsyncadd [#allocation6], 0
      %s30 = sshll.u32 %s1, 4
      %s31 = int_to_ptr.hbm [resolvable:$true] %s30
      %s32 = sshll.u32 [#allocation5], 4
      %s33 = int_to_ptr.vmem [resolvable:$true] %s32
      %38 = dma.hbm_to_vmem [thread:$0]  %s31, 1024, %s33, [#allocation6], 64, 64, 4
    $region9: #{tpu_custom_call.1} parent=1 // pred_fallthru
      _
    // Predicated region
    $region10: #{tpu_custom_call.1} parent=1 // pred_check
      _
    $region11: #{tpu_custom_call.1} parent=1 // pred_check_branch
      %40 = sbr.rel (0) target = $region13
    $region12: #{tpu_custom_call.1} parent=1 // pred_region
      _
    $region13: #{tpu_custom_call.1} parent=1 // pred_fallthru
      _
    // Predicated region
    $region14: #{tpu_custom_call.1} parent=1 // pred_check
      _
    $region15: #{tpu_custom_call.1} parent=1 // pred_check_branch
      %42 = sbr.rel (0) target = $region17
    $region16: #{tpu_custom_call.1} parent=1 // pred_region
      %44 = vsyncadd [#allocation6], 0
      %s45 = sshll.u32 %s3, 4
      %s46 = int_to_ptr.hbm [resolvable:$true] %s45
      %s47 = sshll.u32 [#allocation7], 4
      %s48 = int_to_ptr.vmem [resolvable:$true] %s47
      %53 = dma.hbm_to_vmem [thread:$0]  %s46, 1024, %s48, [#allocation6], 64, 64, 4
    $region17: #{tpu_custom_call.1} parent=1 // pred_fallthru
      _
    // Predicated region
    $region18: #{tpu_custom_call.1} parent=1 // pred_check
      _
    $region19: #{tpu_custom_call.1} parent=1 // pred_check_branch
      %55 = sbr.rel (0) target = $region21
    $region20: #{tpu_custom_call.1} parent=1 // pred_region
      _
    $region21: #{tpu_custom_call.1} parent=1 // pred_fallthru
      _
    // Predicated region
    $region22: #{tpu_custom_call.1} parent=1 // pred_check
      _
    $region23: #{tpu_custom_call.1} parent=1 // pred_check_branch
      %57 = sbr.rel (0) target = $region25
    $region24: #{tpu_custom_call.1} parent=1 // pred_region
      %59 = dma.done [#allocation3], 128
    $region25: #{tpu_custom_call.1} parent=1 // pred_fallthru
      _
    // Predicated region
    $region26: #{tpu_custom_call.1} parent=1 // pred_check
      _
    $region27: #{tpu_custom_call.1} parent=1 // pred_check_branch
      %61 = sbr.rel (0) target = $region29
    $region28: #{tpu_custom_call.1} parent=1 // pred_region
      %63 = dma.done [#allocation6], 1024
    $region29: #{tpu_custom_call.1} parent=1 // pred_fallthru
      _
    // Predicated region
    $region30: #{tpu_custom_call.1} parent=1 // pred_check
      _
    $region31: #{tpu_custom_call.1} parent=1 // pred_check_branch
      %65 = sbr.rel (0) target = $region33
    $region32: #{tpu_custom_call.1} parent=1 // pred_region
      %67 = dma.done [#allocation6], 1024
    $region33: #{tpu_custom_call.1} parent=1 // pred_fallthru
      _
    %v68 = vld [vmem:[#allocation2] sm:$0xf]
    %v69 = vld [vmem:[#allocation2 + $0x4] sm:$0xf]
    %v70 = vld [vmem:[#allocation5] sm:$0xf]
    %v71 = vld [vmem:[#allocation5 + $0x4] sm:$0xf]
    %v72 = vld [vmem:[#allocation5 + $0x8] sm:$0xf]
    %v73 = vld [vmem:[#allocation5 + $0xc] sm:$0xf]
    %v74 = vld [vmem:[#allocation5 + $0x10] sm:$0xf]
    %v75 = vld [vmem:[#allocation5 + $0x14] sm:$0xf]
    %v76 = vld [vmem:[#allocation5 + $0x18] sm:$0xf]
    %v77 = vld [vmem:[#allocation5 + $0x1c] sm:$0xf]
    %v78 = vld [vmem:[#allocation5 + $0x20] sm:$0xf]
    %v79 = vld [vmem:[#allocation5 + $0x24] sm:$0xf]
    %v80 = vld [vmem:[#allocation5 + $0x28] sm:$0xf]
    %v81 = vld [vmem:[#allocation5 + $0x2c] sm:$0xf]
    %v82 = vld [vmem:[#allocation5 + $0x30] sm:$0xf]
    %v83 = vld [vmem:[#allocation5 + $0x34] sm:$0xf]
    %v84 = vld [vmem:[#allocation5 + $0x38] sm:$0xf]
    %v85 = vld [vmem:[#allocation5 + $0x3c] sm:$0xf]
    %v86 = vld [vmem:[%s2] sm:$0x1]
    %v87 = vunpack.c.l.bf16 %v86
    %v88 = vperm.slane %v87, 0
    %v91 = vunpack.c.l.b16 %v68
    %v92 = vunpack.c.l.b16 %v69
    %v93 = vpack.c.b16 %v92, %v91
    %v111 = vunpack.c.l.b16 %v70
    %v112 = vunpack.c.l.b16 %v71
    %v113 = vunpack.c.l.b16 %v72
    %v114 = vunpack.c.l.b16 %v73
    %v115 = vunpack.c.l.b16 %v74
    %v116 = vunpack.c.l.b16 %v75
    %v117 = vunpack.c.l.b16 %v76
    %v118 = vunpack.c.l.b16 %v77
    %v119 = vunpack.c.l.b16 %v78
    %v120 = vunpack.c.l.b16 %v79
    %v121 = vunpack.c.l.b16 %v80
    %v122 = vunpack.c.l.b16 %v81
    %v123 = vunpack.c.l.b16 %v82
    %v124 = vunpack.c.l.b16 %v83
    %v125 = vunpack.c.l.b16 %v84
    %v126 = vunpack.c.l.b16 %v85
    %v127 = vpack.c.b16 %v112, %v111
    %v128 = vpack.c.b16 %v114, %v113
    %v129 = vpack.c.b16 %v116, %v115
    %v130 = vpack.c.b16 %v118, %v117
    %v131 = vpack.c.b16 %v120, %v119
    %v132 = vpack.c.b16 %v122, %v121
    %v133 = vpack.c.b16 %v124, %v123
    %v134 = vpack.c.b16 %v126, %v125
    %143 = vmatpush.bf16.msra.mxu0 %v134
    %144 = vmatpush.bf16.msra.mxu0 %v133
    %145 = vmatpush.bf16.msra.mxu0 %v132
    %146 = vmatpush.bf16.msra.mxu0 %v131
    %147 = vmatpush.bf16.msra.mxu0 %v130
    %148 = vmatpush.bf16.msra.mxu0 %v129
    %149 = vmatpush.bf16.msra.mxu0 %v128
    %150 = vmatpush.bf16.msra.mxu0 %v127
    %151 = vmatmul.bf16.gmra.mxu0 %v93
    %v152 = vpop.f32.mrf.mxu0
    %v153 = vadd.f32 %v88, %v152
    %v154 = vpop.f32.mrf.mxu0
    %v155 = vadd.f32 %v88, %v154
    %156 = vdwg.mxu0
    %v157 = vmax.f32 %v153, 0.0
    %v158 = vmax.f32 %v155, 0.0
    %v159 = vpack.c.bf16 %v158, %v157
    %v160 = vld [vmem:[#allocation7] sm:$0xf]
    %v161 = vld [vmem:[#allocation7 + $0x4] sm:$0xf]
    %v162 = vld [vmem:[#allocation7 + $0x8] sm:$0xf]
    %v163 = vld [vmem:[#allocation7 + $0xc] sm:$0xf]
    %v164 = vld [vmem:[#allocation7 + $0x10] sm:$0xf]
    %v165 = vld [vmem:[#allocation7 + $0x14] sm:$0xf]
    %v166 = vld [vmem:[#allocation7 + $0x18] sm:$0xf]
    %v167 = vld [vmem:[#allocation7 + $0x1c] sm:$0xf]
    %v168 = vld [vmem:[#allocation7 + $0x20] sm:$0xf]
    %v169 = vld [vmem:[#allocation7 + $0x24] sm:$0xf]
    %v170 = vld [vmem:[#allocation7 + $0x28] sm:$0xf]
    %v171 = vld [vmem:[#allocation7 + $0x2c] sm:$0xf]
    %v172 = vld [vmem:[#allocation7 + $0x30] sm:$0xf]
    %v173 = vld [vmem:[#allocation7 + $0x34] sm:$0xf]
    %v174 = vld [vmem:[#allocation7 + $0x38] sm:$0xf]
    %v175 = vld [vmem:[#allocation7 + $0x3c] sm:$0xf]
    %v176 = vld [vmem:[%s4] sm:$0x1]
    %v177 = vunpack.c.l.bf16 %v176
    %v178 = vperm.slane %v177, 0
    %v195 = vunpack.c.l.b16 %v160
    %v196 = vunpack.c.l.b16 %v161
    %v197 = vunpack.c.l.b16 %v162
    %v198 = vunpack.c.l.b16 %v163
    %v199 = vunpack.c.l.b16 %v164
    %v200 = vunpack.c.l.b16 %v165
    %v201 = vunpack.c.l.b16 %v166
    %v202 = vunpack.c.l.b16 %v167
    %v203 = vunpack.c.l.b16 %v168
    %v204 = vunpack.c.l.b16 %v169
    %v205 = vunpack.c.l.b16 %v170
    %v206 = vunpack.c.l.b16 %v171
    %v207 = vunpack.c.l.b16 %v172
    %v208 = vunpack.c.l.b16 %v173
    %v209 = vunpack.c.l.b16 %v174
    %v210 = vunpack.c.l.b16 %v175
    %v211 = vpack.c.b16 %v196, %v195
    %v212 = vpack.c.b16 %v198, %v197
    %v213 = vpack.c.b16 %v200, %v199
    %v214 = vpack.c.b16 %v202, %v201
    %v215 = vpack.c.b16 %v204, %v203
    %v216 = vpack.c.b16 %v206, %v205
    %v217 = vpack.c.b16 %v208, %v207
    %v218 = vpack.c.b16 %v210, %v209
    %227 = vmatpush.bf16.msra.mxu0 %v218
    %228 = vmatpush.bf16.msra.mxu0 %v217
    %229 = vmatpush.bf16.msra.mxu0 %v216
    %230 = vmatpush.bf16.msra.mxu0 %v215
    %231 = vmatpush.bf16.msra.mxu0 %v214
    %232 = vmatpush.bf16.msra.mxu0 %v213
    %233 = vmatpush.bf16.msra.mxu0 %v212
    %234 = vmatpush.bf16.msra.mxu0 %v211
    %235 = vmatmul.bf16.gmra.mxu0 %v159
    %v236 = vpop.f32.mrf.mxu0
    %v237 = vadd.f32 %v178, %v236
    %v238 = vpop.f32.mrf.mxu0
    %v239 = vadd.f32 %v178, %v238
    %240 = vdwg.mxu0
    %v241 = vmax.f32 %v237, 0.0
    %v242 = vmax.f32 %v239, 0.0
    %v243 = vunpack.c.l.bf16 %v68
    %v244 = vunpack.c.l.bf16 %v69
    %v245 = vadd.f32 %v243, %v241
    %v246 = vadd.f32 %v244, %v242
    %v247 = vpack.c.bf16 %v245, %v245
    %v248 = vpack.c.bf16 %v246, %v246
    %249 = vst [vmem:[#allocation8] sm:$0xf] %v247
    %250 = vst [vmem:[#allocation8 + $0x4] sm:$0xf] %v248
    // Predicated region
    $region34: #{tpu_custom_call.1} parent=1 // pred_check
      _
    $region35: #{tpu_custom_call.1} parent=1 // pred_check_branch
      %252 = sbr.rel (0) target = $region37
    $region36: #{tpu_custom_call.1} parent=1 // pred_region
      %254 = vsyncadd [#allocation4], 0
      %s255 = sshll.u32 [#allocation8], 4
      %s256 = int_to_ptr.vmem [resolvable:$true] %s255
      %s257 = sshll.u32 %s5, 4
      %s258 = int_to_ptr.hbm [resolvable:$true] %s257
      %263 = dma.vmem_to_hbm [thread:$0]  %s256, 128, %s258, [#allocation4], 64, 64, 4
    $region37: #{tpu_custom_call.1} parent=1 // pred_fallthru
      _
    // Predicated region
    $region38: #{tpu_custom_call.1} parent=1 // pred_check
      _
    $region39: #{tpu_custom_call.1} parent=1 // pred_check_branch
      %265 = sbr.rel (0) target = $region41
    $region40: #{tpu_custom_call.1} parent=1 // pred_region
      %267 = dma.done [#allocation4], 128
    $region41: #{tpu_custom_call.1} parent=1 // pred_fallthru
      _
    %268 = vsyncpa [#allocation3], 1
    %269 = vsyncpa [#allocation6], 1
    %270 = vsyncpa [#allocation4], 1

</llo_original>
